<compile_context>
chip_gen: v5e
topology: v5e:2x2
jax: 0.10.0
libtpu: 0.0.40
codegen_flags: <defaults>
</compile_context>

<pallas_src>
import functools

import jax
import jax.numpy as jnp
from jax.experimental import pallas as pl
from jax.experimental.pallas import tpu as pltpu

EPS = 1e-5  # PyTorch InstanceNorm2d default


def _round_up(x, m):
    return ((x + m - 1) // m) * m


def _cdiv(a, b):
    return -(-a // b)


# ---------------- Kernel 1: InstanceNorm + ReLU (lane-dense rows) ----------------

def _inorm_relu_kernel(x_ref, o_ref):
    # x_ref block: (tr, H*W); each row is one (n, c) instance.
    x = x_ref[...].astype(jnp.float32)
    # Single-pass statistics: var = E[x^2] - mean^2 (halves the cross-lane reduce).
    mean = jnp.mean(x, axis=-1, keepdims=True)
    ex2 = jnp.mean(x * x, axis=-1, keepdims=True)
    var = jnp.maximum(ex2 - mean * mean, 0.0)       # biased var (PyTorch IN)
    y = (x - mean) * jax.lax.rsqrt(var + EPS)
    o_ref[...] = jnp.maximum(y, 0.0).astype(o_ref.dtype)


def instance_norm_relu(x, out_dtype=jnp.bfloat16):
    n, c, h, w = x.shape
    rows, hw = n * c, h * w
    # VMEM-aware row tile: f32 in + bf16 out, double buffered (~12 B/elem) + temps.
    tr = max(8, min(512, (8 * 1024 * 1024) // max(1, hw * 16)))
    tr = 1 << (tr.bit_length() - 1)              # power of two, multiple of 8
    while tr > 8 and _cdiv(rows, tr) < 2:        # keep >=2 tiles for v7x's two cores
        tr //= 2
    rows_p = _cdiv(rows, tr) * tr
    x2 = x.reshape(rows, hw)                     # contiguous reshape (free)
    if rows_p != rows:
        x2 = jnp.pad(x2, ((0, rows_p - rows), (0, 0)))   # zero rows are harmless
    y2 = pl.pallas_call(
        _inorm_relu_kernel,
        out_shape=jax.ShapeDtypeStruct((rows_p, hw), out_dtype),
        grid_spec=pltpu.PrefetchScalarGridSpec(
            num_scalar_prefetch=0,
            grid=(rows_p // tr,),
            in_specs=[pl.BlockSpec((tr, hw), lambda i: (i, 0))],
            out_specs=pl.BlockSpec((tr, hw), lambda i: (i, 0)),
        ),
        compiler_params=pltpu.CompilerParams(dimension_semantics=("parallel",)),
    )(x2)
    return y2[:rows].reshape(n, c, h, w)


# ---------------- Kernel 2: fused 3x3 / stride-2 conv as 9 tap-matmuls -----------

def _conv9_kernel(w_ref, y_ref, o_ref, acc_ref, *, wp):
    # w_ref  : (9, t_co, t_ci)        bf16  tap-major weights
    # y_ref  : (1, 2, 2, t_ci, Hp*Wp) bf16  parity-split, zero-padded activations
    # o_ref  : (1, t_co, Hp*Wp)       f32
    # acc_ref: (t_co, Hp*Wp)          f32 VMEM accumulator (resident across ci axis)
    ci = pl.program_id(2)

    @pl.when(ci == 0)
    def _init():
        acc_ref[...] = jnp.zeros_like(acc_ref)

    for kh in range(3):
        for kw in range(3):
            plane = y_ref[0, kh % 2, kw % 2]        # (t_ci, Hp*Wp)
            shift = (kh // 2) * wp + (kw // 2)      # flat halo offset of this tap
            if shift:
                # Lane rotation: rolled[:, p] = plane[:, p + shift].  The wrapped
                # tail only lands on halo positions that are sliced away later.
                plane = jnp.concatenate([plane[:, shift:], plane[:, :shift]], axis=1)
            acc_ref[...] += jnp.dot(w_ref[kh * 3 + kw], plane,
                                    preferred_element_type=jnp.float32)

    @pl.when(ci == pl.num_programs(2) - 1)
    def _finalize():
        o_ref[0] = acc_ref[...].astype(o_ref.dtype)


def conv3x3_stride2(y, weight):
    """y: (N, Cin, H, W) bf16 (normalized+ReLU), weight: (Cout, Cin, 3, 3) f32."""
    n, cin, h, w = y.shape
    cout = weight.shape[0]
    ho, wo = (h - 1) // 2 + 1, (w - 1) // 2 + 1
    hp, wp = ho + 1, wo + 1            # parity-plane extent (one halo row/col)
    hpwp = hp * wp

    # ---- generation-aware tile selection ----------------------------------------
    cin_pad = _round_up(cin, 8)
    y_block_budget = 8 * 1024 * 1024                       # bytes per y buffer
    if 4 * cin_pad * hpwp * 2 <= y_block_budget:
        t_ci = cin_pad                                     # no reduction tiling
    else:
        t_ci = 128 * max(1, y_block_budget // (4 * 128 * hpwp * 2))
        t_ci = min(t_ci, _round_up(cin_pad, 128))
        cin_pad = _round_up(cin_pad, t_ci)
    if cout >= 128:                                        # MXU-native Cout tiles
        t_co = 256 if cout >= 256 else 128
        cout_pad = _round_up(cout, t_co)
    else:
        cout_pad = _round_up(cout, 8)
        t_co = cout_pad

    # ---- glue: single cheap XLA pass (pad + 2x2 parity split; no 9x im2col) -----
    pad_b, pad_r = 2 * hp - 1 - h, 2 * wp - 1 - w
    yp = jnp.pad(y, ((0, 0), (0, cin_pad - cin), (1, pad_b), (1, pad_r)))
    y_par = yp.reshape(n, cin_pad, hp, 2, wp, 2)
    y_par = jnp.transpose(y_par, (0, 3, 5, 1, 2, 4)).reshape(n, 2, 2, cin_pad, hpwp)
    # TODO(synk): fold pad + parity split into kernel 1's output (4 strided stores
    # per row) to remove this last intermediate HBM pass.

    wr = jnp.transpose(weight, (2, 3, 0, 1)).reshape(9, cout, cin)
    wr = jnp.pad(wr, ((0, 0), (0, cout_pad - cout), (0, cin_pad - cin)))
    wr = wr.astype(jnp.bfloat16)

    grid = (n, cout_pad // t_co, cin_pad // t_ci)

    # VMEM working set (double-buffered blocks + accumulator) -> explicit limit.
    est = (2 * 9 * t_co * t_ci * 2          # weights
           + 2 * 4 * t_ci * hpwp * 2        # parity planes
           + 2 * t_co * hpwp * 4            # output block
           + t_co * hpwp * 4)               # accumulator scratch
    vmem_limit = int(min(48 * 1024 * 1024, max(16 * 1024 * 1024, 2 * est)))

    out = pl.pallas_call(
        functools.partial(_conv9_kernel, wp=wp),
        out_shape=jax.ShapeDtypeStruct((n, cout_pad, hpwp), jnp.float32),
        grid_spec=pltpu.PrefetchScalarGridSpec(
            num_scalar_prefetch=0,
            grid=grid,
            in_specs=[
                pl.BlockSpec((9, t_co, t_ci), lambda b, co, ci: (0, co, ci)),
                pl.BlockSpec((1, 2, 2, t_ci, hpwp), lambda b, co, ci: (b, 0, 0, ci, 0)),
            ],
            out_specs=pl.BlockSpec((1, t_co, hpwp), lambda b, co, ci: (b, co, 0)),
            scratch_shapes=[pltpu.VMEM((t_co, hpwp), jnp.float32)],
        ),
        compiler_params=pltpu.CompilerParams(
            dimension_semantics=("parallel", "parallel", "arbitrary"),
            vmem_limit_bytes=vmem_limit,
        ),
        cost_estimate=pl.CostEstimate(
            flops=2 * n * cout_pad * 9 * cin_pad * hpwp,
            transcendentals=0,
            bytes_accessed=(y_par.size * y_par.dtype.itemsize
                            + wr.size * wr.dtype.itemsize
                            + n * cout_pad * hpwp * 4),
        ),
    )(wr, y_par)

    # Free contiguous reshape + cheap slice back to NCHW (drops halo + padding).
    return out.reshape(n, cout_pad, hp, wp)[:, :cout, :ho, :wo]


# --------------------------------- Wrapper ---------------------------------------

@jax.jit
def downsample(x, weight):
    """x: (N, Cin, H, W) f32, weight: (Cout, Cin, 3, 3) f32 -> (N, Cout, Ho, Wo) f32."""
    y = instance_norm_relu(x)            # Pallas kernel 1 (bf16 out)
    return conv3x3_stride2(y, weight)    # Pallas kernel 2 (fused 9-tap conv)


# -------------------------------- Reference --------------------------------------

def reference(x, weight):
    mean = jnp.mean(x, axis=(2, 3), keepdims=True)
    var = jnp.mean((x - mean) ** 2, axis=(2, 3), keepdims=True)
    y = jnp.maximum((x - mean) * jax.lax.rsqrt(var + EPS), 0.0)
    return jax.lax.conv_general_dilated(
        y, weight, window_strides=(2, 2), padding=((1, 1), (1, 1)),
        dimension_numbers=("NCHW", "OIHW", "NCHW"))


# ---------------------------------- Main ------------------------------------------

if __name__ == "__main__":
    key = jax.random.PRNGKey(0)
    kx, kw_ = jax.random.split(key)

    N, Cin, H, W, Cout = 2, 4, 16, 16, 8
    x = jax.random.normal(kx, (N, Cin, H, W), dtype=jnp.float32)

    # Deterministic weight init (kaiming-like scale), Conv2d(Cin, Cout, 3) shape.
    fan_in = Cin * 3 * 3
    weight = jax.random.normal(kw_, (Cout, Cin, 3, 3), dtype=jnp.float32) * (1.0 / fan_in) ** 0.5

    out = downsample(x, weight)
    jax.block_until_ready(out)

    ref = reference(x, weight)
    assert out.shape == (N, Cout, H // 2, W // 2), out.shape
    err = float(jnp.max(jnp.abs(out - ref)))
    assert jnp.allclose(out, ref, atol=5e-2, rtol=5e-2), f"max abs err = {err}"

    print("KERNEL_OK")
</pallas_src>

<mosaic_0001>
module attributes {stable_mosaic.version = 11 : i64} {
  func.func @_inorm_relu_kernel(%arg0: i32, %arg1: memref<8x256xf32, #tpu.memory_space<vmem>>, %arg2: memref<8x256xbf16, #tpu.memory_space<vmem>>) attributes {dimension_semantics = [#tpu.dimension_semantics<parallel>], iteration_bounds = array<i64: 1>, scalar_prefetch = 0 : i64, scratch_operands = 0 : i64, tpu.core_type = #tpu.core_type<tc>, window_params = [{transform_indices = @transform_0, window_bounds = array<i64: 8, 256>}, {transform_indices = @transform_1, window_bounds = array<i64: 8, 256>}]} {
    %c0 = arith.constant 0 : index
    %c0_0 = arith.constant 0 : index
    %0 = vector.load %arg1[%c0, %c0_0] : memref<8x256xf32, #tpu.memory_space<vmem>>, vector<8x256xf32>
    %cst = arith.constant dense<0.000000e+00> : vector<8xf32>
    %1 = vector.multi_reduction <add>, %0, %cst [1] : vector<8x256xf32> to vector<8xf32>
    %2 = vector.shape_cast %1 : vector<8xf32> to vector<8x1xf32>
    %cst_1 = arith.constant 2.560000e+02 : f32
    %3 = vector.broadcast %cst_1 : f32 to vector<8x1xf32>
    %4 = arith.divf %2, %3 : vector<8x1xf32>
    %5 = arith.mulf %0, %0 : vector<8x256xf32>
    %cst_2 = arith.constant dense<0.000000e+00> : vector<8xf32>
    %6 = vector.multi_reduction <add>, %5, %cst_2 [1] : vector<8x256xf32> to vector<8xf32>
    %7 = vector.shape_cast %6 : vector<8xf32> to vector<8x1xf32>
    %cst_3 = arith.constant 2.560000e+02 : f32
    %8 = vector.broadcast %cst_3 : f32 to vector<8x1xf32>
    %9 = arith.divf %7, %8 : vector<8x1xf32>
    %10 = arith.mulf %4, %4 : vector<8x1xf32>
    %11 = arith.subf %9, %10 : vector<8x1xf32>
    %cst_4 = arith.constant 0.000000e+00 : f32
    %12 = vector.broadcast %cst_4 : f32 to vector<8x1xf32>
    %13 = arith.maximumf %11, %12 : vector<8x1xf32>
    %14 = vector.broadcast %4 : vector<8x1xf32> to vector<8x256xf32>
    %15 = arith.subf %0, %14 : vector<8x256xf32>
    %cst_5 = arith.constant 9.99999974E-6 : f32
    %16 = vector.broadcast %cst_5 : f32 to vector<8x1xf32>
    %17 = arith.addf %13, %16 : vector<8x1xf32>
    %18 = math.rsqrt %17 : vector<8x1xf32>
    %19 = vector.broadcast %18 : vector<8x1xf32> to vector<8x256xf32>
    %20 = arith.mulf %15, %19 : vector<8x256xf32>
    %cst_6 = arith.constant 0.000000e+00 : f32
    %21 = vector.broadcast %cst_6 : f32 to vector<8x256xf32>
    %22 = arith.maximumf %20, %21 : vector<8x256xf32>
    %23 = arith.truncf %22 : vector<8x256xf32> to vector<8x256xbf16>
    %c0_7 = arith.constant 0 : index
    %c0_8 = arith.constant 0 : index
    %24 = vector.load %arg2[%c0_7, %c0_8] : memref<8x256xbf16, #tpu.memory_space<vmem>>, vector<8x256xbf16>
    tpu.vector_store %arg2[%c0_7, %c0_8], %23 {strides = array<i32>} : memref<8x256xbf16, #tpu.memory_space<vmem>>, vector<8x256xbf16>,
    return
  }
  func.func @transform_0(%arg0: i32) -> (i32, i32) {
    %c0_i32 = arith.constant 0 : i32
    %c0_i32_0 = arith.constant 0 : i32
    return %arg0, %c0_i32 : i32, i32
  }
  func.func @transform_1(%arg0: i32) -> (i32, i32) {
    %c0_i32 = arith.constant 0 : i32
    %c0_i32_0 = arith.constant 0 : i32
    return %arg0, %c0_i32 : i32, i32
  }
}

module attributes {stable_mosaic.version = 11 : i64} {
  func.func @_conv9_kernel(%arg0: i32, %arg1: i32, %arg2: i32, %arg3: memref<9x8x8xbf16, #tpu.memory_space<vmem>>, %arg4: memref<1x2x2x8x81xbf16, #tpu.memory_space<vmem>>, %arg5: memref<1x8x81xf32, #tpu.memory_space<vmem>>, %arg6: memref<8x81xf32, #tpu.memory_space<vmem>>) attributes {dimension_semantics = [#tpu.dimension_semantics<parallel>, #tpu.dimension_semantics<parallel>, #tpu.dimension_semantics<arbitrary>], iteration_bounds = array<i64: 2, 1, 1>, scalar_prefetch = 0 : i64, scratch_operands = 1 : i64, tpu.core_type = #tpu.core_type<tc>, window_params = [{transform_indices = @transform_0, window_bounds = array<i64: 9, 8, 8>}, {transform_indices = @transform_1, window_bounds = array<i64: 1, 2, 2, 8, 81>}, {transform_indices = @transform_2, window_bounds = array<i64: 1, 8, 81>}]} {
    %c0_i32 = arith.constant 0 : i32
    %0 = arith.cmpi eq, %arg2, %c0_i32 : i32
    %1 = arith.extui %0 : i1 to i32
    %c0_i32_0 = arith.constant 0 : i32
    %2 = arith.cmpi ne, %1, %c0_i32_0 : i32
    scf.if %2 {
      %cst_110 = arith.constant 0.000000e+00 : f32
      %93 = vector.broadcast %cst_110 : f32 to vector<8x81xf32>
      %c0_111 = arith.constant 0 : index
      %c0_112 = arith.constant 0 : index
      %94 = vector.load %arg6[%c0_111, %c0_112] : memref<8x81xf32, #tpu.memory_space<vmem>>, vector<8x81xf32>
      tpu.vector_store %arg6[%c0_111, %c0_112], %93 {strides = array<i32>} : memref<8x81xf32, #tpu.memory_space<vmem>>, vector<8x81xf32>,
    } else {
    }
    %c0 = arith.constant 0 : index
    %c0_1 = arith.constant 0 : index
    %c0_2 = arith.constant 0 : index
    %c0_3 = arith.constant 0 : index
    %c0_4 = arith.constant 0 : index
    %3 = vector.load %arg4[%c0, %c0_1, %c0_2, %c0_3, %c0_4] : memref<1x2x2x8x81xbf16, #tpu.memory_space<vmem>>, vector<1x1x1x8x81xbf16>
    %4 = vector.shape_cast %3 : vector<1x1x1x8x81xbf16> to vector<8x81xbf16>
    %c0_5 = arith.constant 0 : index
    %c0_6 = arith.constant 0 : index
    %5 = vector.load %arg6[%c0_5, %c0_6] : memref<8x81xf32, #tpu.memory_space<vmem>>, vector<8x81xf32>
    %c0_7 = arith.constant 0 : index
    %c0_8 = arith.constant 0 : index
    %c0_9 = arith.constant 0 : index
    %6 = vector.load %arg3[%c0_7, %c0_8, %c0_9] : memref<9x8x8xbf16, #tpu.memory_space<vmem>>, vector<1x8x8xbf16>
    %7 = vector.shape_cast %6 : vector<1x8x8xbf16> to vector<8x8xbf16>
    %cst = arith.constant dense<0.000000e+00> : vector<8x81xf32>
    %8 = tpu.matmul %7, %4, %cst {dimension_numbers = #tpu.dot_dimension_numbers<[1], [0], [0], [1], [0, 0, 1, 1], [], []>} : vector<8x8xbf16>, vector<8x81xbf16>, vector<8x81xf32> -> vector<8x81xf32>
    %9 = arith.addf %5, %8 : vector<8x81xf32>
    %c0_10 = arith.constant 0 : index
    %c0_11 = arith.constant 0 : index
    %10 = vector.load %arg6[%c0_10, %c0_11] : memref<8x81xf32, #tpu.memory_space<vmem>>, vector<8x81xf32>
    tpu.vector_store %arg6[%c0_10, %c0_11], %9 {strides = array<i32>} : memref<8x81xf32, #tpu.memory_space<vmem>>, vector<8x81xf32>,
    %c0_12 = arith.constant 0 : index
    %c0_13 = arith.constant 0 : index
    %c1 = arith.constant 1 : index
    %c0_14 = arith.constant 0 : index
    %c0_15 = arith.constant 0 : index
    %11 = vector.load %arg4[%c0_12, %c0_13, %c1, %c0_14, %c0_15] : memref<1x2x2x8x81xbf16, #tpu.memory_space<vmem>>, vector<1x1x1x8x81xbf16>
    %12 = vector.shape_cast %11 : vector<1x1x1x8x81xbf16> to vector<8x81xbf16>
    %c0_16 = arith.constant 0 : index
    %c0_17 = arith.constant 0 : index
    %13 = vector.load %arg6[%c0_16, %c0_17] : memref<8x81xf32, #tpu.memory_space<vmem>>, vector<8x81xf32>
    %c1_18 = arith.constant 1 : index
    %c0_19 = arith.constant 0 : index
    %c0_20 = arith.constant 0 : index
    %14 = vector.load %arg3[%c1_18, %c0_19, %c0_20] : memref<9x8x8xbf16, #tpu.memory_space<vmem>>, vector<1x8x8xbf16>
    %15 = vector.shape_cast %14 : vector<1x8x8xbf16> to vector<8x8xbf16>
    %cst_21 = arith.constant dense<0.000000e+00> : vector<8x81xf32>
    %16 = tpu.matmul %15, %12, %cst_21 {dimension_numbers = #tpu.dot_dimension_numbers<[1], [0], [0], [1], [0, 0, 1, 1], [], []>} : vector<8x8xbf16>, vector<8x81xbf16>, vector<8x81xf32> -> vector<8x81xf32>
    %17 = arith.addf %13, %16 : vector<8x81xf32>
    %c0_22 = arith.constant 0 : index
    %c0_23 = arith.constant 0 : index
    %18 = vector.load %arg6[%c0_22, %c0_23] : memref<8x81xf32, #tpu.memory_space<vmem>>, vector<8x81xf32>
    tpu.vector_store %arg6[%c0_22, %c0_23], %17 {strides = array<i32>} : memref<8x81xf32, #tpu.memory_space<vmem>>, vector<8x81xf32>,
    %c0_24 = arith.constant 0 : index
    %c0_25 = arith.constant 0 : index
    %c0_26 = arith.constant 0 : index
    %c0_27 = arith.constant 0 : index
    %c0_28 = arith.constant 0 : index
    %19 = vector.load %arg4[%c0_24, %c0_25, %c0_26, %c0_27, %c0_28] : memref<1x2x2x8x81xbf16, #tpu.memory_space<vmem>>, vector<1x1x1x8x81xbf16>
    %20 = vector.shape_cast %19 : vector<1x1x1x8x81xbf16> to vector<8x81xbf16>
    %21 = vector.extract_strided_slice %20 {offsets = [0, 1], sizes = [8, 80], strides = [1, 1]} : vector<8x81xbf16> to vector<8x80xbf16>
    %22 = vector.extract_strided_slice %20 {offsets = [0, 0], sizes = [8, 1], strides = [1, 1]} : vector<8x81xbf16> to vector<8x1xbf16>
    %23 = tpu.concatenate %21, %22 in 1 : vector<8x80xbf16>, vector<8x1xbf16> -> vector<8x81xbf16>
    %c0_29 = arith.constant 0 : index
    %c0_30 = arith.constant 0 : index
    %24 = vector.load %arg6[%c0_29, %c0_30] : memref<8x81xf32, #tpu.memory_space<vmem>>, vector<8x81xf32>
    %c2 = arith.constant 2 : index
    %c0_31 = arith.constant 0 : index
    %c0_32 = arith.constant 0 : index
    %25 = vector.load %arg3[%c2, %c0_31, %c0_32] : memref<9x8x8xbf16, #tpu.memory_space<vmem>>, vector<1x8x8xbf16>
    %26 = vector.shape_cast %25 : vector<1x8x8xbf16> to vector<8x8xbf16>
    %cst_33 = arith.constant dense<0.000000e+00> : vector<8x81xf32>
    %27 = tpu.matmul %26, %23, %cst_33 {dimension_numbers = #tpu.dot_dimension_numbers<[1], [0], [0], [1], [0, 0, 1, 1], [], []>} : vector<8x8xbf16>, vector<8x81xbf16>, vector<8x81xf32> -> vector<8x81xf32>
    %28 = arith.addf %24, %27 : vector<8x81xf32>
    %c0_34 = arith.constant 0 : index
    %c0_35 = arith.constant 0 : index
    %29 = vector.load %arg6[%c0_34, %c0_35] : memref<8x81xf32, #tpu.memory_space<vmem>>, vector<8x81xf32>
    tpu.vector_store %arg6[%c0_34, %c0_35], %28 {strides = array<i32>} : memref<8x81xf32, #tpu.memory_space<vmem>>, vector<8x81xf32>,
    %c0_36 = arith.constant 0 : index
    %c1_37 = arith.constant 1 : index
    %c0_38 = arith.constant 0 : index
    %c0_39 = arith.constant 0 : index
    %c0_40 = arith.constant 0 : index
    %30 = vector.load %arg4[%c0_36, %c1_37, %c0_38, %c0_39, %c0_40] : memref<1x2x2x8x81xbf16, #tpu.memory_space<vmem>>, vector<1x1x1x8x81xbf16>
    %31 = vector.shape_cast %30 : vector<1x1x1x8x81xbf16> to vector<8x81xbf16>
    %c0_41 = arith.constant 0 : index
    %c0_42 = arith.constant 0 : index
    %32 = vector.load %arg6[%c0_41, %c0_42] : memref<8x81xf32, #tpu.memory_space<vmem>>, vector<8x81xf32>
    %c3 = arith.constant 3 : index
    %c0_43 = arith.constant 0 : index
    %c0_44 = arith.constant 0 : index
    %33 = vector.load %arg3[%c3, %c0_43, %c0_44] : memref<9x8x8xbf16, #tpu.memory_space<vmem>>, vector<1x8x8xbf16>
    %34 = vector.shape_cast %33 : vector<1x8x8xbf16> to vector<8x8xbf16>
    %cst_45 = arith.constant dense<0.000000e+00> : vector<8x81xf32>
    %35 = tpu.matmul %34, %31, %cst_45 {dimension_numbers = #tpu.dot_dimension_numbers<[1], [0], [0], [1], [0, 0, 1, 1], [], []>} : vector<8x8xbf16>, vector<8x81xbf16>, vector<8x81xf32> -> vector<8x81xf32>
    %36 = arith.addf %32, %35 : vector<8x81xf32>
    %c0_46 = arith.constant 0 : index
    %c0_47 = arith.constant 0 : index
    %37 = vector.load %arg6[%c0_46, %c0_47] : memref<8x81xf32, #tpu.memory_space<vmem>>, vector<8x81xf32>
    tpu.vector_store %arg6[%c0_46, %c0_47], %36 {strides = array<i32>} : memref<8x81xf32, #tpu.memory_space<vmem>>, vector<8x81xf32>,
    %c0_48 = arith.constant 0 : index
    %c1_49 = arith.constant 1 : index
    %c1_50 = arith.constant 1 : index
    %c0_51 = arith.constant 0 : index
    %c0_52 = arith.constant 0 : index
    %38 = vector.load %arg4[%c0_48, %c1_49, %c1_50, %c0_51, %c0_52] : memref<1x2x2x8x81xbf16, #tpu.memory_space<vmem>>, vector<1x1x1x8x81xbf16>
    %39 = vector.shape_cast %38 : vector<1x1x1x8x81xbf16> to vector<8x81xbf16>
    %c0_53 = arith.constant 0 : index
    %c0_54 = arith.constant 0 : index
    %40 = vector.load %arg6[%c0_53, %c0_54] : memref<8x81xf32, #tpu.memory_space<vmem>>, vector<8x81xf32>
    %c4 = arith.constant 4 : index
    %c0_55 = arith.constant 0 : index
    %c0_56 = arith.constant 0 : index
    %41 = vector.load %arg3[%c4, %c0_55, %c0_56] : memref<9x8x8xbf16, #tpu.memory_space<vmem>>, vector<1x8x8xbf16>
    %42 = vector.shape_cast %41 : vector<1x8x8xbf16> to vector<8x8xbf16>
    %cst_57 = arith.constant dense<0.000000e+00> : vector<8x81xf32>
    %43 = tpu.matmul %42, %39, %cst_57 {dimension_numbers = #tpu.dot_dimension_numbers<[1], [0], [0], [1], [0, 0, 1, 1], [], []>} : vector<8x8xbf16>, vector<8x81xbf16>, vector<8x81xf32> -> vector<8x81xf32>
    %44 = arith.addf %40, %43 : vector<8x81xf32>
    %c0_58 = arith.constant 0 : index
    %c0_59 = arith.constant 0 : index
    %45 = vector.load %arg6[%c0_58, %c0_59] : memref<8x81xf32, #tpu.memory_space<vmem>>, vector<8x81xf32>
    tpu.vector_store %arg6[%c0_58, %c0_59], %44 {strides = array<i32>} : memref<8x81xf32, #tpu.memory_space<vmem>>, vector<8x81xf32>,
    %c0_60 = arith.constant 0 : index
    %c1_61 = arith.constant 1 : index
    %c0_62 = arith.constant 0 : index
    %c0_63 = arith.constant 0 : index
    %c0_64 = arith.constant 0 : index
    %46 = vector.load %arg4[%c0_60, %c1_61, %c0_62, %c0_63, %c0_64] : memref<1x2x2x8x81xbf16, #tpu.memory_space<vmem>>, vector<1x1x1x8x81xbf16>
    %47 = vector.shape_cast %46 : vector<1x1x1x8x81xbf16> to vector<8x81xbf16>
    %48 = vector.extract_strided_slice %47 {offsets = [0, 1], sizes = [8, 80], strides = [1, 1]} : vector<8x81xbf16> to vector<8x80xbf16>
    %49 = vector.extract_strided_slice %47 {offsets = [0, 0], sizes = [8, 1], strides = [1, 1]} : vector<8x81xbf16> to vector<8x1xbf16>
    %50 = tpu.concatenate %48, %49 in 1 : vector<8x80xbf16>, vector<8x1xbf16> -> vector<8x81xbf16>
    %c0_65 = arith.constant 0 : index
    %c0_66 = arith.constant 0 : index
    %51 = vector.load %arg6[%c0_65, %c0_66] : memref<8x81xf32, #tpu.memory_space<vmem>>, vector<8x81xf32>
    %c5 = arith.constant 5 : index
    %c0_67 = arith.constant 0 : index
    %c0_68 = arith.constant 0 : index
    %52 = vector.load %arg3[%c5, %c0_67, %c0_68] : memref<9x8x8xbf16, #tpu.memory_space<vmem>>, vector<1x8x8xbf16>
    %53 = vector.shape_cast %52 : vector<1x8x8xbf16> to vector<8x8xbf16>
    %cst_69 = arith.constant dense<0.000000e+00> : vector<8x81xf32>
    %54 = tpu.matmul %53, %50, %cst_69 {dimension_numbers = #tpu.dot_dimension_numbers<[1], [0], [0], [1], [0, 0, 1, 1], [], []>} : vector<8x8xbf16>, vector<8x81xbf16>, vector<8x81xf32> -> vector<8x81xf32>
    %55 = arith.addf %51, %54 : vector<8x81xf32>
    %c0_70 = arith.constant 0 : index
    %c0_71 = arith.constant 0 : index
    %56 = vector.load %arg6[%c0_70, %c0_71] : memref<8x81xf32, #tpu.memory_space<vmem>>, vector<8x81xf32>
    tpu.vector_store %arg6[%c0_70, %c0_71], %55 {strides = array<i32>} : memref<8x81xf32, #tpu.memory_space<vmem>>, vector<8x81xf32>,
    %c0_72 = arith.constant 0 : index
    %c0_73 = arith.constant 0 : index
    %c0_74 = arith.constant 0 : index
    %c0_75 = arith.constant 0 : index
    %c0_76 = arith.constant 0 : index
    %57 = vector.load %arg4[%c0_72, %c0_73, %c0_74, %c0_75, %c0_76] : memref<1x2x2x8x81xbf16, #tpu.memory_space<vmem>>, vector<1x1x1x8x81xbf16>
    %58 = vector.shape_cast %57 : vector<1x1x1x8x81xbf16> to vector<8x81xbf16>
    %59 = vector.extract_strided_slice %58 {offsets = [0, 9], sizes = [8, 72], strides = [1, 1]} : vector<8x81xbf16> to vector<8x72xbf16>
    %60 = vector.extract_strided_slice %58 {offsets = [0, 0], sizes = [8, 9], strides = [1, 1]} : vector<8x81xbf16> to vector<8x9xbf16>
    %61 = tpu.concatenate %59, %60 in 1 : vector<8x72xbf16>, vector<8x9xbf16> -> vector<8x81xbf16>
    %c0_77 = arith.constant 0 : index
    %c0_78 = arith.constant 0 : index
    %62 = vector.load %arg6[%c0_77, %c0_78] : memref<8x81xf32, #tpu.memory_space<vmem>>, vector<8x81xf32>
    %c6 = arith.constant 6 : index
    %c0_79 = arith.constant 0 : index
    %c0_80 = arith.constant 0 : index
    %63 = vector.load %arg3[%c6, %c0_79, %c0_80] : memref<9x8x8xbf16, #tpu.memory_space<vmem>>, vector<1x8x8xbf16>
    %64 = vector.shape_cast %63 : vector<1x8x8xbf16> to vector<8x8xbf16>
    %cst_81 = arith.constant dense<0.000000e+00> : vector<8x81xf32>
    %65 = tpu.matmul %64, %61, %cst_81 {dimension_numbers = #tpu.dot_dimension_numbers<[1], [0], [0], [1], [0, 0, 1, 1], [], []>} : vector<8x8xbf16>, vector<8x81xbf16>, vector<8x81xf32> -> vector<8x81xf32>
    %66 = arith.addf %62, %65 : vector<8x81xf32>
    %c0_82 = arith.constant 0 : index
    %c0_83 = arith.constant 0 : index
    %67 = vector.load %arg6[%c0_82, %c0_83] : memref<8x81xf32, #tpu.memory_space<vmem>>, vector<8x81xf32>
    tpu.vector_store %arg6[%c0_82, %c0_83], %66 {strides = array<i32>} : memref<8x81xf32, #tpu.memory_space<vmem>>, vector<8x81xf32>,
    %c0_84 = arith.constant 0 : index
    %c0_85 = arith.constant 0 : index
    %c1_86 = arith.constant 1 : index
    %c0_87 = arith.constant 0 : index
    %c0_88 = arith.constant 0 : index
    %68 = vector.load %arg4[%c0_84, %c0_85, %c1_86, %c0_87, %c0_88] : memref<1x2x2x8x81xbf16, #tpu.memory_space<vmem>>, vector<1x1x1x8x81xbf16>
    %69 = vector.shape_cast %68 : vector<1x1x1x8x81xbf16> to vector<8x81xbf16>
    %70 = vector.extract_strided_slice %69 {offsets = [0, 9], sizes = [8, 72], strides = [1, 1]} : vector<8x81xbf16> to vector<8x72xbf16>
    %71 = vector.extract_strided_slice %69 {offsets = [0, 0], sizes = [8, 9], strides = [1, 1]} : vector<8x81xbf16> to vector<8x9xbf16>
    %72 = tpu.concatenate %70, %71 in 1 : vector<8x72xbf16>, vector<8x9xbf16> -> vector<8x81xbf16>
    %c0_89 = arith.constant 0 : index
    %c0_90 = arith.constant 0 : index
    %73 = vector.load %arg6[%c0_89, %c0_90] : memref<8x81xf32, #tpu.memory_space<vmem>>, vector<8x81xf32>
    %c7 = arith.constant 7 : index
    %c0_91 = arith.constant 0 : index
    %c0_92 = arith.constant 0 : index
    %74 = vector.load %arg3[%c7, %c0_91, %c0_92] : memref<9x8x8xbf16, #tpu.memory_space<vmem>>, vector<1x8x8xbf16>
    %75 = vector.shape_cast %74 : vector<1x8x8xbf16> to vector<8x8xbf16>
    %cst_93 = arith.constant dense<0.000000e+00> : vector<8x81xf32>
    %76 = tpu.matmul %75, %72, %cst_93 {dimension_numbers = #tpu.dot_dimension_numbers<[1], [0], [0], [1], [0, 0, 1, 1], [], []>} : vector<8x8xbf16>, vector<8x81xbf16>, vector<8x81xf32> -> vector<8x81xf32>
    %77 = arith.addf %73, %76 : vector<8x81xf32>
    %c0_94 = arith.constant 0 : index
    %c0_95 = arith.constant 0 : index
    %78 = vector.load %arg6[%c0_94, %c0_95] : memref<8x81xf32, #tpu.memory_space<vmem>>, vector<8x81xf32>
    tpu.vector_store %arg6[%c0_94, %c0_95], %77 {strides = array<i32>} : memref<8x81xf32, #tpu.memory_space<vmem>>, vector<8x81xf32>,
    %c0_96 = arith.constant 0 : index
    %c0_97 = arith.constant 0 : index
    %c0_98 = arith.constant 0 : index
    %c0_99 = arith.constant 0 : index
    %c0_100 = arith.constant 0 : index
    %79 = vector.load %arg4[%c0_96, %c0_97, %c0_98, %c0_99, %c0_100] : memref<1x2x2x8x81xbf16, #tpu.memory_space<vmem>>, vector<1x1x1x8x81xbf16>
    %80 = vector.shape_cast %79 : vector<1x1x1x8x81xbf16> to vector<8x81xbf16>
    %81 = vector.extract_strided_slice %80 {offsets = [0, 10], sizes = [8, 71], strides = [1, 1]} : vector<8x81xbf16> to vector<8x71xbf16>
    %82 = vector.extract_strided_slice %80 {offsets = [0, 0], sizes = [8, 10], strides = [1, 1]} : vector<8x81xbf16> to vector<8x10xbf16>
    %83 = tpu.concatenate %81, %82 in 1 : vector<8x71xbf16>, vector<8x10xbf16> -> vector<8x81xbf16>
    %c0_101 = arith.constant 0 : index
    %c0_102 = arith.constant 0 : index
    %84 = vector.load %arg6[%c0_101, %c0_102] : memref<8x81xf32, #tpu.memory_space<vmem>>, vector<8x81xf32>
    %c8 = arith.constant 8 : index
    %c0_103 = arith.constant 0 : index
    %c0_104 = arith.constant 0 : index
    %85 = vector.load %arg3[%c8, %c0_103, %c0_104] : memref<9x8x8xbf16, #tpu.memory_space<vmem>>, vector<1x8x8xbf16>
    %86 = vector.shape_cast %85 : vector<1x8x8xbf16> to vector<8x8xbf16>
    %cst_105 = arith.constant dense<0.000000e+00> : vector<8x81xf32>
    %87 = tpu.matmul %86, %83, %cst_105 {dimension_numbers = #tpu.dot_dimension_numbers<[1], [0], [0], [1], [0, 0, 1, 1], [], []>} : vector<8x8xbf16>, vector<8x81xbf16>, vector<8x81xf32> -> vector<8x81xf32>
    %88 = arith.addf %84, %87 : vector<8x81xf32>
    %c0_106 = arith.constant 0 : index
    %c0_107 = arith.constant 0 : index
    %89 = vector.load %arg6[%c0_106, %c0_107] : memref<8x81xf32, #tpu.memory_space<vmem>>, vector<8x81xf32>
    tpu.vector_store %arg6[%c0_106, %c0_107], %88 {strides = array<i32>} : memref<8x81xf32, #tpu.memory_space<vmem>>, vector<8x81xf32>,
    %c0_i32_108 = arith.constant 0 : i32
    %90 = arith.cmpi eq, %arg2, %c0_i32_108 : i32
    %91 = arith.extui %90 : i1 to i32
    %c0_i32_109 = arith.constant 0 : i32
    %92 = arith.cmpi ne, %91, %c0_i32_109 : i32
    scf.if %92 {
      %c0_110 = arith.constant 0 : index
      %c0_111 = arith.constant 0 : index
      %93 = vector.load %arg6[%c0_110, %c0_111] : memref<8x81xf32, #tpu.memory_space<vmem>>, vector<8x81xf32>
      %c0_112 = arith.constant 0 : index
      %c0_113 = arith.constant 0 : index
      %c0_114 = arith.constant 0 : index
      %94 = vector.load %arg5[%c0_112, %c0_113, %c0_114] : memref<1x8x81xf32, #tpu.memory_space<vmem>>, vector<1x8x81xf32>
      %95 = vector.shape_cast %94 : vector<1x8x81xf32> to vector<8x81xf32>
      %96 = vector.shape_cast %93 : vector<8x81xf32> to vector<1x8x81xf32>
      tpu.vector_store %arg5[%c0_112, %c0_113, %c0_114], %96 {strides = array<i32>} : memref<1x8x81xf32, #tpu.memory_space<vmem>>, vector<1x8x81xf32>,
    } else {
    }
    return
  }
  func.func @transform_0(%arg0: i32, %arg1: i32, %arg2: i32) -> (i32, i32, i32) {
    %c0_i32 = arith.constant 0 : i32
    %c0_i32_0 = arith.constant 0 : i32
    return %c0_i32, %arg1, %arg2 : i32, i32, i32
  }
  func.func @transform_1(%arg0: i32, %arg1: i32, %arg2: i32) -> (i32, i32, i32, i32, i32) {
    %c0_i32 = arith.constant 0 : i32
    %c0_i32_0 = arith.constant 0 : i32
    %c0_i32_1 = arith.constant 0 : i32
    %c0_i32_2 = arith.constant 0 : i32
    return %arg0, %c0_i32, %c0_i32_0, %arg2, %c0_i32_1 : i32, i32, i32, i32, i32
  }
  func.func @transform_2(%arg0: i32, %arg1: i32, %arg2: i32) -> (i32, i32, i32) {
    %c0_i32 = arith.constant 0 : i32
    %c0_i32_0 = arith.constant 0 : i32
    return %arg0, %arg1, %c0_i32 : i32, i32, i32
  }
}

</mosaic_0001>

<llo_original>
// kernel: downsample.2
$region0: #{downsample.2}
  #allocation0 [shape = 'u32[]', space=smem, size = 0x4, offset = 0x4, fixed_abs, tag = 'smem constant byte address 0x4 - core index']
  #allocation1 [shape = 'u32[72,128]{1,0:T(1,128)}', space=vmem, size = 0x9000, scoped, tag = 'internal scratch']
  %s0 = inlined_call_operand.vmem [shape: f32[8,256], index: 0, kind: input, shape index: {}]
  %s1 = inlined_call_operand.vmem [shape: bf16[8,256], index: 1, kind: output, shape index: {}]
  %s2 = sld [smem:[#allocation0]]
  $region14: #{downsample.2} parent=0
    _
  %s4 = ssub.s32 1, %s2
  %s5 = scalar_select 0, %s4, %s2
  // Predicated region
  $region2: #{downsample.2} parent=0 // pred_check
    _
  $region3: #{downsample.2} parent=0 // pred_check_branch
    %7 = sbr.rel (0) target = $region5
  $region4: #{downsample.2} parent=0 // pred_region
    _
  $region5: #{downsample.2} parent=0 // pred_fallthru
    _
  %v8 = vld [vmem:[%s0] sm:$0xff]
  %v9 = vld [vmem:[%s0 + $0x8] sm:$0xff]
  %v10 = vadd.f32 %v8, %v9
  %11 = vadd.xlane.f32.xlu0 %v10
  %v12 = vpop.xlane.xlu0 %11
  %v13 = vrcp.pop 256.0
  %v14 = vmul.f32 256.0, %v13
  %v15 = vsub.f32 1.0, %v14
  %v16 = vmul.f32 %v13, %v15
  %v17 = vadd.f32 %v13, %v16
  %vm18 = vweird.f32 %v13
  %v19 = vsel %vm18, %v13, %v17
  %v20 = vmul.f32 %v12, %v19
  %v21 = vmul.f32 %v8, %v8
  %v22 = vmul.f32 %v9, %v9
  %v23 = vadd.f32 %v21, %v22
  %24 = vadd.xlane.f32.xlu0 %v23
  %v25 = vpop.xlane.xlu0 %24
  %v26 = vmul.f32 %v25, %v19
  %v27 = vmul.f32 %v20, %v20
  %v28 = vsub.f32 %v26, %v27
  %v29 = vmax.f32 %v28, 0.0
  %v30 = vsub.f32 %v8, %v20
  %v31 = vsub.f32 %v9, %v20
  %v32 = vadd.f32 %v29, 1e-05
  %v33 = vrsqrt.pop %v32
  %v34 = vmul.f32 %v33, %v32
  %v35 = vmul.f32 %v34, %v33
  %v36 = vmul.f32 0.5, %v35
  %v37 = vsub.f32 1.5, %v36
  %v38 = vmul.f32 %v33, %v37
  %vm39 = vweird.f32 %v32
  %vm40 = vweird.f32 %v33
  %vm41 = vmor %vm39, %vm40
  %v42 = vsel %vm41, %v33, %v38
  %v43 = vmul.f32 %v30, %v42
  %v44 = vmul.f32 %v31, %v42
  %v45 = vmax.f32 %v43, 0.0
  %v46 = vmax.f32 %v44, 0.0
  %v47 = vpack.c.bf16 %v46, %v45
  %48 = vst [vmem:[%s1] sm:$0xff] %v47
  // Predicated region
  $region6: #{downsample.2} parent=0 // pred_check
    _
  $region7: #{downsample.2} parent=0 // pred_check_branch
    %50 = sbr.rel (0) target = $region9
  $region8: #{downsample.2} parent=0 // pred_region
    _
  $region9: #{downsample.2} parent=0 // pred_fallthru
    _
  // Predicated region
  $region10: #{downsample.2} parent=0 // pred_check
    _
  $region11: #{downsample.2} parent=0 // pred_check_branch
    %52 = sbr.rel (0) target = $region13
  $region12: #{downsample.2} parent=0 // pred_region
    _
  $region13: #{downsample.2} parent=0 // pred_fallthru
    _

// kernel: downsample.3
$region0: #{downsample.3}
  #allocation0 [shape = 'u32[]', space=smem, size = 0x4, offset = 0x4, fixed_abs, tag = 'smem constant byte address 0x4 - core index']
  #allocation1 [shape = 'u32[72,128]{1,0:T(1,128)}', space=vmem, size = 0x9000, scoped, tag = 'internal scratch']
  #allocation2 [shape = 'f32[8,81]{1,0:T(8,128)}', space=vmem, size = 0x1000, scoped, tag = 'scratch operand']
  %s0 = inlined_call_operand.vmem [shape: bf16[9,8,8], index: 0, kind: input, shape index: {}]
  %s1 = inlined_call_operand.vmem [shape: bf16[2,2,2,8,81], index: 1, kind: input, shape index: {}]
  %s2 = inlined_call_operand.vmem [shape: f32[2,8,81], index: 2, kind: output, shape index: {}]
  %s3 = sld [smem:[#allocation0]]
  $region49: #{downsample.3} parent=0
    _
  %s5 = ssub.s32 1, %s3
  %s6 = scalar_select 0, %s5, %s3
  loop: start=0, step=1, limit=4
  $region2: #{downsample.3} parent=0 // loop_pre_header
    _
  $region3: #{downsample.3} parent=0 // loop_header
    %s8 = sphi 0, %s12
    %p9 = scmp.ge.s32.totalorder %s8, 4
    %s15 = sphi 0, %s34
    %s16 = sphi 0, %s30
    %s17 = sphi 0, %s26
    %s18 = sphi 0, %s15
    %s19 = sphi 0, %s16
    %s20 = sphi 0, %s17
    %s21 = sphi 0, %s18
    %s22 = sphi 0, %s19
    %s23 = sphi 0, %s20
    %s39 = sphi 0, %s41
    %s42 = sphi 0, %s39
    %s43 = sphi 0, %s42
    %s59 = sphi 0, %s43
    %s67 = sphi 0, %s69
    %s70 = sphi 0, %s67
    %s71 = sphi 0, %s70
    %s87 = sphi 0, %s71
    %s95 = sphi 0, %s97
    %s98 = sphi 0, %s95
    %s99 = sphi 0, %s98
    %s115 = sphi 0, %s99
  $region4: #{downsample.3} parent=0 // loop_header_branch
    %11 = sbr.rel (%p9) target = $region8
  $region5: #{downsample.3} parent=0 // loop_body
    %s13 = ssub.s32 %s8, 1
    %s14 = ssub.s32 %s8, 2
    %s24 = sadd.s32 1, %s17
    %p25 = scmp.ge.s32.totalorder %s24, 1
    %s26 = scalar_select %p25, 0, %s24
    %s27 = sadd.s32 1, %s16
    %s28 = scalar_select %p25, %s27, %s16
    %p29 = scmp.ge.s32.totalorder %s28, 1
    %s30 = scalar_select %p29, 0, %s28
    %s31 = sadd.s32 1, %s15
    %s32 = scalar_select %p29, %s31, %s15
    %p33 = scmp.ge.s32.totalorder %s32, 2
    %s34 = scalar_select %p33, 0, %s32
    %s35 = ssub.s32 %s16, %s30
    %s36 = ssub.s32 %s17, %s26
    %s37 = sor.u32 %s35, %s36
    %p38 = scmp.eq.s32.totalorder %s37, 0
    %s40 = sadd.s32 %s39, 1
    %s41 = scalar_select %p38, %s39, %s40
    %p44 = pneg %p38
    %p45 = scmp.eq.s32.totalorder %s8, 1
    %p46 = por %p44, %p45
    %p47 = scmp.ne.s32.totalorder %s39, %s42
    %p48 = scmp.eq.s32.totalorder %s8, 0
    %p49 = por %p47, %p48
    %p50 = scmp.ne.s32.totalorder %s39, %s42
    %p51 = scmp.eq.s32.totalorder %s13, 1
    %p52 = por %p50, %p51
    %p53 = scmp.ne.s32.totalorder %s42, %s43
    %p54 = scmp.eq.s32.totalorder %s13, 0
    %p55 = por %p53, %p54
    %p56 = scmp.ne.s32.totalorder %s42, %s43
    %p57 = scmp.eq.s32.totalorder %s14, 1
    %p58 = por %p56, %p57
    %p60 = scmp.ne.s32.totalorder %s43, %s59
    %p61 = scmp.eq.s32.totalorder %s14, 0
    %p62 = por %p60, %p61
    %s63 = ssub.s32 %s15, %s34
    %s64 = ssub.s32 %s17, %s26
    %s65 = sor.u32 %s63, %s64
    %p66 = scmp.eq.s32.totalorder %s65, 0
    %s68 = sadd.s32 %s67, 1
    %s69 = scalar_select %p66, %s67, %s68
    %p72 = pneg %p66
    %p73 = scmp.eq.s32.totalorder %s8, 1
    %p74 = por %p72, %p73
    %p75 = scmp.ne.s32.totalorder %s67, %s70
    %p76 = scmp.eq.s32.totalorder %s8, 0
    %p77 = por %p75, %p76
    %p78 = scmp.ne.s32.totalorder %s67, %s70
    %p79 = scmp.eq.s32.totalorder %s13, 1
    %p80 = por %p78, %p79
    %p81 = scmp.ne.s32.totalorder %s70, %s71
    %p82 = scmp.eq.s32.totalorder %s13, 0
    %p83 = por %p81, %p82
    %p84 = scmp.ne.s32.totalorder %s70, %s71
    %p85 = scmp.eq.s32.totalorder %s14, 1
    %p86 = por %p84, %p85
    %p88 = scmp.ne.s32.totalorder %s71, %s87
    %p89 = scmp.eq.s32.totalorder %s14, 0
    %p90 = por %p88, %p89
    %s91 = ssub.s32 %s15, %s34
    %s92 = ssub.s32 %s16, %s30
    %s93 = sor.u32 %s91, %s92
    %p94 = scmp.eq.s32.totalorder %s93, 0
    %s96 = sadd.s32 %s95, 1
    %s97 = scalar_select %p94, %s95, %s96
    %p100 = pneg %p94
    %p101 = scmp.eq.s32.totalorder %s8, 1
    %p102 = por %p100, %p101
    %p103 = scmp.ne.s32.totalorder %s95, %s98
    %p104 = scmp.eq.s32.totalorder %s8, 0
    %p105 = por %p103, %p104
    %p106 = scmp.ne.s32.totalorder %s95, %s98
    %p107 = scmp.eq.s32.totalorder %s13, 1
    %p108 = por %p106, %p107
    %p109 = scmp.ne.s32.totalorder %s98, %s99
    %p110 = scmp.eq.s32.totalorder %s13, 0
    %p111 = por %p109, %p110
    %p112 = scmp.ne.s32.totalorder %s98, %s99
    %p113 = scmp.eq.s32.totalorder %s14, 1
    %p114 = por %p112, %p113
    %p116 = scmp.ne.s32.totalorder %s99, %s115
    %p117 = scmp.eq.s32.totalorder %s14, 0
    %p118 = por %p116, %p117
    %p119 = scmp.le.s32.totalorder 1, %s8
    %p120 = scmp.lt.s32.totalorder %s8, 3
    %p121 = pnand %p119, %p120
    %p122 = pneg %p121
    // Predicated region
    $region9: #{downsample.3} parent=5 // pred_check
      _
    $region10: #{downsample.3} parent=5 // pred_check_branch
      %124 = sbr.rel (%p121) target = $region12
    $region11: #{downsample.3} parent=5 // pred_region
      %s125 = ssub.s32 %s8, 1
      // Predicated region
      $region13: #{downsample.3} parent=11 // pred_check
        %p126 = pneg %p55
      $region14: #{downsample.3} parent=11 // pred_check_branch
        %128 = sbr.rel (%p126) target = $region16
      $region15: #{downsample.3} parent=11 // pred_region
        %p129 = scmp.lt.s32.totalorder %s19, 0
        %s130 = scalar_select %p129, %s19, 0
        %p131 = scmp.lt.s32.totalorder %s20, 0
        %s132 = scalar_select %p131, %s20, 0
        %s133 = sadd.s32 %s132, %s130
        %s134 = smul.addr %s133, 4
        %s135 = scalar_lea.vmem %s0, %s134
      $region16: #{downsample.3} parent=11 // pred_fallthru
        _
    $region12: #{downsample.3} parent=5 // pred_fallthru
      _
    %p136 = scmp.lt.s32.totalorder %s8, 2
    // Predicated region
    $region17: #{downsample.3} parent=5 // pred_check
      %p137 = pneg %p136
    $region18: #{downsample.3} parent=5 // pred_check_branch
      %139 = sbr.rel (%p137) target = $region20
    $region19: #{downsample.3} parent=5 // pred_region
      // Predicated region
      $region21: #{downsample.3} parent=19 // pred_check
        %p140 = pneg %p77
      $region22: #{downsample.3} parent=19 // pred_check_branch
        %142 = sbr.rel (%p140) target = $region24
      $region23: #{downsample.3} parent=19 // pred_region
        %p143 = scmp.lt.s32.totalorder %s15, 1
        %s144 = scalar_select %p143, %s15, 1
        %p145 = scmp.lt.s32.totalorder %s17, 0
        %s146 = scalar_select %p145, %s17, 0
        %s147 = smul.addr %s144, 4
        %s148 = sadd.s32 %s146, %s147
        %s149 = smul.addr %s148, 4
        %s150 = scalar_lea.vmem %s1, %s149
      $region24: #{downsample.3} parent=19 // pred_fallthru
        _
    $region20: #{downsample.3} parent=5 // pred_fallthru
      _
    %p151 = scmp.le.s32.totalorder 1, %s8
    %p152 = scmp.lt.s32.totalorder %s8, 3
    %p153 = pnand %p151, %p152
    %p154 = pneg %p153
    // Predicated region
    $region25: #{downsample.3} parent=5 // pred_check
      _
    $region26: #{downsample.3} parent=5 // pred_check_branch
      %156 = sbr.rel (%p153) target = $region28
    $region27: #{downsample.3} parent=5 // pred_region
      %s157 = ssub.s32 %s8, 1
      %p158 = scmp.lt.s32.totalorder %s19, 0
      %s159 = scalar_select %p158, %s19, 0
      %p160 = scmp.lt.s32.totalorder %s20, 0
      %s161 = scalar_select %p160, %s20, 0
      %s162 = sadd.s32 %s161, %s159
      %s163 = smul.addr %s162, 4
      %s164 = scalar_lea.vmem %s0, %s163
      %p165 = pneg %p55
      %p166 = pneg %p52
      %p167 = scmp.lt.s32.totalorder %s18, 1
      %s168 = scalar_select %p167, %s18, 1
      %p169 = scmp.lt.s32.totalorder %s20, 0
      %s170 = scalar_select %p169, %s20, 0
      %s171 = smul.addr %s168, 4
      %s172 = sadd.s32 %s170, %s171
      %s173 = smul.addr %s172, 4
      %s174 = scalar_lea.vmem %s1, %s173
      %p175 = pneg %p83
      %p176 = pneg %p80
      %p177 = pneg %p111
      %p178 = pneg %p108
      %p179 = scmp.lt.s32.totalorder %s18, 1
      %s180 = scalar_select %p179, %s18, 1
      %p181 = scmp.lt.s32.totalorder %s19, 0
      %s182 = scalar_select %p181, %s19, 0
      %s183 = sadd.s32 %s182, %s180
      %s184 = smul.addr %s183, 8
      %s185 = scalar_lea.vmem %s2, %s184
      %p186 = scmp.lt.s32.totalorder %s19, 0
      %s187 = scalar_select %p186, %s19, 0
      %p188 = scmp.lt.s32.totalorder %s20, 0
      %s189 = scalar_select %p188, %s20, 0
      %s190 = sadd.s32 %s189, %s187
      %s191 = smul.addr %s190, 4
      %s192 = scalar_lea.vmem %s0, %s191
      %p193 = scmp.lt.s32.totalorder %s18, 1
      %s194 = scalar_select %p193, %s18, 1
      %p195 = scmp.lt.s32.totalorder %s20, 0
      %s196 = scalar_select %p195, %s20, 0
      %s197 = smul.addr %s194, 4
      %s198 = sadd.s32 %s196, %s197
      %s199 = smul.addr %s198, 4
      %s200 = scalar_lea.vmem %s1, %s199
      %p201 = scmp.lt.s32.totalorder %s18, 1
      %s202 = scalar_select %p201, %s18, 1
      %p203 = scmp.lt.s32.totalorder %s19, 0
      %s204 = scalar_select %p203, %s19, 0
      %s205 = sadd.s32 %s204, %s202
      %s206 = smul.addr %s205, 8
      %s207 = scalar_lea.vmem %s2, %s206
      %p209 = scmp.eq.s32.totalorder %s20, 0
      // Predicated region
      $region29: #{downsample.3} parent=27 // pred_check
        %p210 = pneg %p209
      $region30: #{downsample.3} parent=27 // pred_check_branch
        %212 = sbr.rel (%p210) target = $region32
      $region31: #{downsample.3} parent=27 // pred_region
        %vm213 = vcmask 662528
        %214 = vst.msk [vmem:[#allocation2] sm:$0xff] %vm213, 0.0
      $region32: #{downsample.3} parent=27 // pred_fallthru
        _
      %v215 = vld [vmem:[%s200] sm:$0xf]
      %v216 = vld [vmem:[#allocation2] sm:$0xff]
      %v217 = vld [vmem:[%s192] sm:$0xf]
      %vm218 = vcmask 64512
      %v220 = vsel %vm218, %v217, 0
      %vm222 = vcmask 1043456
      %v224 = vsel %vm222, %v215, 0
      %226 = vmatpush.bf16.msra.mxu0 0
      %227 = vmatpush.bf16.msra.mxu0 0
      %228 = vmatpush.bf16.msra.mxu0 0
      %229 = vmatpush.bf16.msra.mxu0 0
      %230 = vmatpush.bf16.msra.mxu0 0
      %231 = vmatpush.bf16.msra.mxu0 0
      %232 = vmatpush.bf16.msra.mxu0 0
      %233 = vmatpush.bf16.msra.mxu0 %v224
      %234 = vmatmul.bf16.gmra.mxu0 %v220
      %v235 = vpop.f32.mrf.mxu0
      %v236 = vadd.f32 0.0, %v235
      %v237 = vpop.f32.mrf.mxu0
      %238 = vdwg.mxu0
      %v239 = vadd.f32 %v216, %v236
      %vm240 = vcmask 662528
      %241 = vst.msk [vmem:[#allocation2] sm:$0xff] %vm240, %v239
      %s242 = scalar_lea.vmem %s200, 4
      %v243 = vld [vmem:[%s242] sm:$0xf]
      %v244 = vld [vmem:[#allocation2] sm:$0xff]
      %s245 = scalar_lea.vmem %s192, 4
      %v246 = vld [vmem:[%s245] sm:$0xf]
      %v248 = vsel %vm218, %v246, 0
      %v251 = vsel %vm222, %v243, 0
      %253 = vmatpush.bf16.msra.mxu0 0
      %254 = vmatpush.bf16.msra.mxu0 0
      %255 = vmatpush.bf16.msra.mxu0 0
      %256 = vmatpush.bf16.msra.mxu0 0
      %257 = vmatpush.bf16.msra.mxu0 0
      %258 = vmatpush.bf16.msra.mxu0 0
      %259 = vmatpush.bf16.msra.mxu0 0
      %260 = vmatpush.bf16.msra.mxu0 %v251
      %261 = vmatmul.bf16.gmra.mxu0 %v248
      %v262 = vpop.f32.mrf.mxu0
      %v263 = vadd.f32 0.0, %v262
      %v264 = vpop.f32.mrf.mxu0
      %265 = vdwg.mxu0
      %v266 = vadd.f32 %v244, %v263
      %267 = vst.msk [vmem:[#allocation2] sm:$0xff] %vm240, %v266
      %v268 = vld [vmem:[%s200] sm:$0xf]
      %v270 = vunpack.c.l.b16 %v268
      %v271 = vpack.c.b16 %v270, %v270
      %272 = vrot.lane.b32.xlu0 %v271, 127
      %v273 = vpop.permute.xlu0 %272
      %274 = vrot.lane.b32.xlu0 %v271, 80
      %v275 = vpop.permute.xlu0 %274
      %vm276 = vcmask 654336
      %v279 = vsel %vm276, %v273, %v275
      %v280 = vld [vmem:[#allocation2] sm:$0xff]
      %s281 = scalar_lea.vmem %s192, 8
      %v282 = vld [vmem:[%s281] sm:$0xf]
      %v284 = vsel %vm218, %v282, 0
      %v286 = vsel %vm222, %v279, 0
      %288 = vmatpush.bf16.msra.mxu0 0
      %289 = vmatpush.bf16.msra.mxu0 0
      %290 = vmatpush.bf16.msra.mxu0 0
      %291 = vmatpush.bf16.msra.mxu0 0
      %292 = vmatpush.bf16.msra.mxu0 0
      %293 = vmatpush.bf16.msra.mxu0 0
      %294 = vmatpush.bf16.msra.mxu0 0
      %295 = vmatpush.bf16.msra.mxu0 %v286
      %296 = vmatmul.bf16.gmra.mxu0 %v284
      %v297 = vpop.f32.mrf.mxu0
      %v298 = vadd.f32 0.0, %v297
      %v299 = vpop.f32.mrf.mxu0
      %300 = vdwg.mxu0
      %v301 = vadd.f32 %v280, %v298
      %302 = vst.msk [vmem:[#allocation2] sm:$0xff] %vm240, %v301
      %s303 = scalar_lea.vmem %s200, 8
      %v304 = vld [vmem:[%s303] sm:$0xf]
      %v305 = vld [vmem:[#allocation2] sm:$0xff]
      %s306 = scalar_lea.vmem %s192, 12
      %v307 = vld [vmem:[%s306] sm:$0xf]
      %v309 = vsel %vm218, %v307, 0
      %v312 = vsel %vm222, %v304, 0
      %314 = vmatpush.bf16.msra.mxu0 0
      %315 = vmatpush.bf16.msra.mxu0 0
      %316 = vmatpush.bf16.msra.mxu0 0
      %317 = vmatpush.bf16.msra.mxu0 0
      %318 = vmatpush.bf16.msra.mxu0 0
      %319 = vmatpush.bf16.msra.mxu0 0
      %320 = vmatpush.bf16.msra.mxu0 0
      %321 = vmatpush.bf16.msra.mxu0 %v312
      %322 = vmatmul.bf16.gmra.mxu0 %v309
      %v323 = vpop.f32.mrf.mxu0
      %v324 = vadd.f32 0.0, %v323
      %v325 = vpop.f32.mrf.mxu0
      %326 = vdwg.mxu0
      %v327 = vadd.f32 %v305, %v324
      %328 = vst.msk [vmem:[#allocation2] sm:$0xff] %vm240, %v327
      %s329 = scalar_lea.vmem %s200, 12
      %v330 = vld [vmem:[%s329] sm:$0xf]
      %v331 = vld [vmem:[#allocation2] sm:$0xff]
      %s332 = scalar_lea.vmem %s192, 16
      %v333 = vld [vmem:[%s332] sm:$0xf]
      %v335 = vsel %vm218, %v333, 0
      %v338 = vsel %vm222, %v330, 0
      %340 = vmatpush.bf16.msra.mxu0 0
      %341 = vmatpush.bf16.msra.mxu0 0
      %342 = vmatpush.bf16.msra.mxu0 0
      %343 = vmatpush.bf16.msra.mxu0 0
      %344 = vmatpush.bf16.msra.mxu0 0
      %345 = vmatpush.bf16.msra.mxu0 0
      %346 = vmatpush.bf16.msra.mxu0 0
      %347 = vmatpush.bf16.msra.mxu0 %v338
      %348 = vmatmul.bf16.gmra.mxu0 %v335
      %v349 = vpop.f32.mrf.mxu0
      %v350 = vadd.f32 0.0, %v349
      %v351 = vpop.f32.mrf.mxu0
      %352 = vdwg.mxu0
      %v353 = vadd.f32 %v331, %v350
      %354 = vst.msk [vmem:[#allocation2] sm:$0xff] %vm240, %v353
      %v355 = vld [vmem:[%s303] sm:$0xf]
      %v357 = vunpack.c.l.b16 %v355
      %v358 = vpack.c.b16 %v357, %v357
      %359 = vrot.lane.b32.xlu0 %v358, 127
      %v360 = vpop.permute.xlu0 %359
      %361 = vrot.lane.b32.xlu0 %v358, 80
      %v362 = vpop.permute.xlu0 %361
      %v365 = vsel %vm276, %v360, %v362
      %v366 = vld [vmem:[#allocation2] sm:$0xff]
      %s367 = scalar_lea.vmem %s192, 20
      %v368 = vld [vmem:[%s367] sm:$0xf]
      %v370 = vsel %vm218, %v368, 0
      %v372 = vsel %vm222, %v365, 0
      %374 = vmatpush.bf16.msra.mxu0 0
      %375 = vmatpush.bf16.msra.mxu0 0
      %376 = vmatpush.bf16.msra.mxu0 0
      %377 = vmatpush.bf16.msra.mxu0 0
      %378 = vmatpush.bf16.msra.mxu0 0
      %379 = vmatpush.bf16.msra.mxu0 0
      %380 = vmatpush.bf16.msra.mxu0 0
      %381 = vmatpush.bf16.msra.mxu0 %v372
      %382 = vmatmul.bf16.gmra.mxu0 %v370
      %v383 = vpop.f32.mrf.mxu0
      %v384 = vadd.f32 0.0, %v383
      %v385 = vpop.f32.mrf.mxu0
      %386 = vdwg.mxu0
      %v387 = vadd.f32 %v366, %v384
      %388 = vst.msk [vmem:[#allocation2] sm:$0xff] %vm240, %v387
      %v389 = vld [vmem:[%s200] sm:$0xf]
      %v391 = vunpack.c.l.b16 %v389
      %v392 = vpack.c.b16 %v391, %v391
      %393 = vrot.lane.b32.xlu0 %v392, 119
      %v394 = vpop.permute.xlu0 %393
      %395 = vrot.lane.b32.xlu0 %v392, 72
      %v396 = vpop.permute.xlu0 %395
      %vm397 = vcmask 588800
      %v400 = vsel %vm397, %v394, %v396
      %v401 = vld [vmem:[#allocation2] sm:$0xff]
      %s402 = scalar_lea.vmem %s192, 24
      %v403 = vld [vmem:[%s402] sm:$0xf]
      %v405 = vsel %vm218, %v403, 0
      %v407 = vsel %vm222, %v400, 0
      %409 = vmatpush.bf16.msra.mxu0 0
      %410 = vmatpush.bf16.msra.mxu0 0
      %411 = vmatpush.bf16.msra.mxu0 0
      %412 = vmatpush.bf16.msra.mxu0 0
      %413 = vmatpush.bf16.msra.mxu0 0
      %414 = vmatpush.bf16.msra.mxu0 0
      %415 = vmatpush.bf16.msra.mxu0 0
      %416 = vmatpush.bf16.msra.mxu0 %v407
      %417 = vmatmul.bf16.gmra.mxu0 %v405
      %v418 = vpop.f32.mrf.mxu0
      %v419 = vadd.f32 0.0, %v418
      %v420 = vpop.f32.mrf.mxu0
      %421 = vdwg.mxu0
      %v422 = vadd.f32 %v401, %v419
      %423 = vst.msk [vmem:[#allocation2] sm:$0xff] %vm240, %v422
      %v424 = vld [vmem:[%s242] sm:$0xf]
      %v426 = vunpack.c.l.b16 %v424
      %v427 = vpack.c.b16 %v426, %v426
      %428 = vrot.lane.b32.xlu0 %v427, 119
      %v429 = vpop.permute.xlu0 %428
      %430 = vrot.lane.b32.xlu0 %v427, 72
      %v431 = vpop.permute.xlu0 %430
      %v434 = vsel %vm397, %v429, %v431
      %v435 = vld [vmem:[#allocation2] sm:$0xff]
      %s436 = scalar_lea.vmem %s192, 28
      %v437 = vld [vmem:[%s436] sm:$0xf]
      %v439 = vsel %vm218, %v437, 0
      %v441 = vsel %vm222, %v434, 0
      %443 = vmatpush.bf16.msra.mxu0 0
      %444 = vmatpush.bf16.msra.mxu0 0
      %445 = vmatpush.bf16.msra.mxu0 0
      %446 = vmatpush.bf16.msra.mxu0 0
      %447 = vmatpush.bf16.msra.mxu0 0
      %448 = vmatpush.bf16.msra.mxu0 0
      %449 = vmatpush.bf16.msra.mxu0 0
      %450 = vmatpush.bf16.msra.mxu0 %v441
      %451 = vmatmul.bf16.gmra.mxu0 %v439
      %v452 = vpop.f32.mrf.mxu0
      %v453 = vadd.f32 0.0, %v452
      %v454 = vpop.f32.mrf.mxu0
      %455 = vdwg.mxu0
      %v456 = vadd.f32 %v435, %v453
      %457 = vst.msk [vmem:[#allocation2] sm:$0xff] %vm240, %v456
      %v458 = vld [vmem:[%s200] sm:$0xf]
      %v460 = vunpack.c.l.b16 %v458
      %v461 = vpack.c.b16 %v460, %v460
      %462 = vrot.lane.b32.xlu0 %v461, 118
      %v463 = vpop.permute.xlu0 %462
      %464 = vrot.lane.b32.xlu0 %v461, 71
      %v465 = vpop.permute.xlu0 %464
      %vm466 = vcmask 580608
      %v469 = vsel %vm466, %v463, %v465
      %v470 = vld [vmem:[#allocation2] sm:$0xff]
      %s471 = scalar_lea.vmem %s192, 32
      %v472 = vld [vmem:[%s471] sm:$0xf]
      %v474 = vsel %vm218, %v472, 0
      %v476 = vsel %vm222, %v469, 0
      %478 = vmatpush.bf16.msra.mxu0 0
      %479 = vmatpush.bf16.msra.mxu0 0
      %480 = vmatpush.bf16.msra.mxu0 0
      %481 = vmatpush.bf16.msra.mxu0 0
      %482 = vmatpush.bf16.msra.mxu0 0
      %483 = vmatpush.bf16.msra.mxu0 0
      %484 = vmatpush.bf16.msra.mxu0 0
      %485 = vmatpush.bf16.msra.mxu0 %v476
      %486 = vmatmul.bf16.gmra.mxu0 %v474
      %v487 = vpop.f32.mrf.mxu0
      %v488 = vadd.f32 0.0, %v487
      %v489 = vpop.f32.mrf.mxu0
      %490 = vdwg.mxu0
      %v491 = vadd.f32 %v470, %v488
      %492 = vst.msk [vmem:[#allocation2] sm:$0xff] %vm240, %v491
      // Predicated region
      $region33: #{downsample.3} parent=27 // pred_check
        %p493 = pneg %p209
      $region34: #{downsample.3} parent=27 // pred_check_branch
        %495 = sbr.rel (%p493) target = $region36
      $region35: #{downsample.3} parent=27 // pred_region
        %v496 = vld [vmem:[#allocation2] sm:$0xff]
        %497 = vst.msk [vmem:[%s207] sm:$0xff] %vm240, %v496
      $region36: #{downsample.3} parent=27 // pred_fallthru
        _
      %p498 = scmp.lt.s32.totalorder %s18, 1
      %s499 = scalar_select %p498, %s18, 1
      %p500 = scmp.lt.s32.totalorder %s19, 0
      %s501 = scalar_select %p500, %s19, 0
      %s502 = sadd.s32 %s501, %s499
      %s503 = smul.addr %s502, 8
      %s504 = scalar_lea.vmem %s2, %s503
      // Predicated region
      $region37: #{downsample.3} parent=27 // pred_check
        %p505 = pneg %p108
      $region38: #{downsample.3} parent=27 // pred_check_branch
        %507 = sbr.rel (%p505) target = $region40
      $region39: #{downsample.3} parent=27 // pred_region
        _
      $region40: #{downsample.3} parent=27 // pred_fallthru
        _
    $region28: #{downsample.3} parent=5 // pred_fallthru
      _
    %p508 = scmp.le.s32.totalorder 2, %s8
    // Predicated region
    $region41: #{downsample.3} parent=5 // pred_check
      %p509 = pneg %p508
    $region42: #{downsample.3} parent=5 // pred_check_branch
      %511 = sbr.rel (%p509) target = $region44
    $region43: #{downsample.3} parent=5 // pred_region
      %s512 = ssub.s32 %s8, 2
      // Predicated region
      $region45: #{downsample.3} parent=43 // pred_check
        %p513 = pneg %p114
      $region46: #{downsample.3} parent=43 // pred_check_branch
        %515 = sbr.rel (%p513) target = $region48
      $region47: #{downsample.3} parent=43 // pred_region
        %p516 = scmp.lt.s32.totalorder %s21, 1
        %s517 = scalar_select %p516, %s21, 1
        %p518 = scmp.lt.s32.totalorder %s22, 0
        %s519 = scalar_select %p518, %s22, 0
        %s520 = sadd.s32 %s519, %s517
        %s521 = smul.addr %s520, 8
        %s522 = scalar_lea.vmem %s2, %s521
      $region48: #{downsample.3} parent=43 // pred_fallthru
        _
    $region44: #{downsample.3} parent=5 // pred_fallthru
      _
  $region6: #{downsample.3} parent=0 // loop_footer
    %s12 = sadd.s32 1, %s8
  $region7: #{downsample.3} parent=0 // loop_footer_branch
    %7 = sbr.rel target = $region3
  $region8: #{downsample.3} parent=0 // loop_exit
    _

</llo_original>
